<compile_context>
chip_gen: v7x
topology: tpu7x:2x2x1
jax: 0.10.0
libtpu: 0.0.40
codegen_flags: <defaults>
</compile_context>

<pallas_src>
import jax
import jax.numpy as jnp
from jax.experimental import pallas as pl
from jax.experimental.pallas import tpu as pltpu


_LANE = 128
# Double-buffered input working-set budget (u + v, 2 buffers each).  Leaves
# headroom under v7x's 64 MiB physical VMEM while staying >= 1-2 MiB per grid
# step so the ~0.35 us per-step overhead is amortized on all generations.
_VMEM_INPUT_BUDGET_BYTES = 24 * 1024 * 1024


def _cdiv(a, b):
    return -(-a // b)


def _round_up(x, m):
    return _cdiv(x, m) * m


def _choose_block_rows(n, f, itemsize):
    """Batch tile size: (a) double-buffered input working set fits the VMEM
    budget, (b) big enough to amortize per-grid-step overhead, (c) never
    larger than the batch, (d) >= 2 grid steps for mid-sized batches so both
    v7x TensorCores get work."""
    per_row_bytes = 2 * 2 * f * itemsize            # u + v, double-buffered
    tm = (_VMEM_INPUT_BUDGET_BYTES // max(per_row_bytes, 1)) // _LANE * _LANE
    tm = max(_LANE, min(tm, 32768))
    if n > 2 * _LANE and tm >= n:
        # Whole batch fits in one tile: split in two for the v7x megacore.
        tm = max(_LANE, _round_up(_cdiv(n, 2), _LANE))
    if tm >= n:
        # Single full block (also covers tiny n < 128); block_shape == array
        # dims, so the (8, 128) divisibility rule is satisfied trivially.
        tm = n
    return tm


def edge_predictor_kernel(u_ref, v_ref, w_ref, b_ref, o_ref):
    # u_ref, v_ref : (TM, F)  native dtype (f32/bf16), streamed tiles
    # w_ref        : (2, F)   input dtype (row 0 = user half, row 1 = wine half)
    # b_ref        : (1, 1)   f32 scalar in SMEM
    # o_ref        : (1, TM)  f32 lane-dense output tile
    w = w_ref[...]
    wu = w[0:1, :]                                   # (1, F)
    wv = w[1:2, :]                                   # (1, F)

    # a . b^T: contract the shared (last) F axis of both operands -- the
    # canonical MXU pattern (same dims as q @ k^T), so the big (TM, F) tile is
    # consumed directly by the MXU with f32 accumulation, no upcast, no
    # materialized transpose.
    dims = (((1,), (1,)), ((), ()))
    logits = (
        jax.lax.dot_general(wu, u_ref[...], dims, preferred_element_type=jnp.float32)
        + jax.lax.dot_general(wv, v_ref[...], dims, preferred_element_type=jnp.float32)
        + b_ref[0, 0]
    )                                                # (1, TM) f32

    # Sigmoid: exp goes to the EUP; the final reciprocal stays a full-precision
    # divide (only TM elements per tile -- nowhere near a binding slot now that
    # the f32 upcasts are gone).  Flip to pl.reciprocal(..., approx=True) to
    # route it to the EUP if ~1e-4 relative error is acceptable downstream.
    o_ref[...] = (1.0 / (1.0 + jnp.exp(-logits))).astype(o_ref.dtype)


def edge_predictor(user_emb, wine_emb, weight, bias):
    """user_emb/wine_emb: (N, F); weight: (1, 2F) nn.Linear layout; bias: (1,)."""
    N, F = user_emb.shape
    assert wine_emb.shape == (N, F)
    assert weight.shape == (1, 2 * F)

    in_dtype = user_emb.dtype
    itemsize = jnp.dtype(in_dtype).itemsize

    # Split the concat-feature weight into per-input halves: one tiny (2, F)
    # block, grid-invariant (single DMA, resident across steps).  Cast to the
    # INPUT dtype so the MXU sees matched operands (e.g. bf16 x bf16 -> f32
    # acc) and no in-kernel cast of the big tiles is needed.
    w = jnp.concatenate([weight[:, :F], weight[:, F:]], axis=0).astype(in_dtype)
    b = bias.reshape(1, 1).astype(jnp.float32)

    tm = _choose_block_rows(N, F, itemsize)
    grid = (_cdiv(N, tm),)

    # Scoped-VMEM limit matched to the actual working set (+ headroom), so the
    # pipeline keeps double-buffering on v5e's 16 MiB default and stays well
    # under v7x's 64 MiB physical VMEM.
    vmem_limit = (
        2 * 2 * tm * F * itemsize      # double-buffered u, v tiles
        + 2 * 2 * F * itemsize         # (2, F) weight block (double-buffered)
        + 2 * tm * 4                   # double-buffered (1, tm) f32 output
        + (2 << 20)                    # compiler scratch headroom
    )
    vmem_limit = int(min(max(vmem_limit, 4 << 20), 64 << 20))

    cost = pl.CostEstimate(
        flops=4 * N * F,                       # two F-length MACs per row
        transcendentals=N,                     # one exp per row
        bytes_accessed=2 * N * F * itemsize + N * 4 + 2 * F * itemsize + 4,
    )

    scores_lane = pl.pallas_call(
        edge_predictor_kernel,
        out_shape=jax.ShapeDtypeStruct((1, N), jnp.float32),
        grid=grid,
        in_specs=[
            pl.BlockSpec((tm, F), lambda i: (i, 0)),            # user tile (streamed)
            pl.BlockSpec((tm, F), lambda i: (i, 0)),            # wine tile (streamed)
            pl.BlockSpec((2, F), lambda i: (0, 0)),             # weights: grid-invariant
            pl.BlockSpec(memory_space=pltpu.MemorySpace.SMEM),  # bias scalar in SMEM
        ],
        out_specs=pl.BlockSpec((1, tm), lambda i: (0, i)),      # lane-dense scores
        compiler_params=pltpu.CompilerParams(
            dimension_semantics=("parallel",),                  # megacore on v7x
            vmem_limit_bytes=vmem_limit,
        ),
        cost_estimate=cost,
    )(user_emb, wine_emb, w, b)

    # Module semantics: (N, 1) column of scores.  This relayout is an O(4N B)
    # XLA op outside the kernel; callers that accept a flat (1, N)/(N,) layout
    # can consume `scores_lane` directly and skip it.
    return scores_lane.reshape(N, 1)


def reference(user_emb, wine_emb, weight, bias):
    interaction = jnp.concatenate([user_emb, wine_emb], axis=1)
    return jax.nn.sigmoid(interaction @ weight.T + bias)


if __name__ == "__main__":
    key = jax.random.PRNGKey(0)
    k_u, k_v, k_w, k_b = jax.random.split(key, 4)

    N = 8             # batch (user-wine pairs)
    feature_dim = 32  # per-input feature dim; Linear in_features = 2 * 32 = 64

    user_emb = jax.random.normal(k_u, (N, feature_dim), dtype=jnp.float32)
    wine_emb = jax.random.normal(k_v, (N, feature_dim), dtype=jnp.float32)

    # Deterministic nn.Linear-style init: U(-1/sqrt(in), 1/sqrt(in)).
    bound = 1.0 / float(jnp.sqrt(jnp.float32(2 * feature_dim)))
    weight = jax.random.uniform(
        k_w, (1, 2 * feature_dim), minval=-bound, maxval=bound, dtype=jnp.float32
    )
    bias = jax.random.uniform(
        k_b, (1,), minval=-bound, maxval=bound, dtype=jnp.float32
    )

    score = edge_predictor(user_emb, wine_emb, weight, bias)
    score = jax.block_until_ready(score)

    expected = reference(user_emb, wine_emb, weight, bias)
    assert score.shape == (N, 1)
    assert jnp.allclose(score, expected, atol=1e-5, rtol=1e-5)

    print("KERNEL_OK")
</pallas_src>

<mosaic_0001>
module attributes {stable_mosaic.version = 11 : i64} {
  func.func @edge_predictor_kernel(%arg0: i32, %arg1: memref<8x32xf32, #tpu.memory_space<vmem>>, %arg2: memref<8x32xf32, #tpu.memory_space<vmem>>, %arg3: memref<2x32xf32, #tpu.memory_space<vmem>>, %arg4: memref<1x1xf32, #tpu.memory_space<smem>>, %arg5: memref<1x8xf32, #tpu.memory_space<vmem>>) attributes {dimension_semantics = [#tpu.dimension_semantics<parallel>], iteration_bounds = array<i64: 1>, scalar_prefetch = 0 : i64, scratch_operands = 0 : i64, tpu.core_type = #tpu.core_type<tc>, window_params = [{transform_indices = @transform_0, window_bounds = array<i64: 8, 32>}, {transform_indices = @transform_1, window_bounds = array<i64: 8, 32>}, {pipeline_mode = #tpu.pipeline_mode<synchronous>, transform_indices = @transform_2, window_bounds = array<i64: 2, 32>}, {transform_indices = @transform_3, window_bounds = array<i64: 1, 1>}, {transform_indices = @transform_4, window_bounds = array<i64: 1, 8>}]} {
    %c0 = arith.constant 0 : index
    %c0_0 = arith.constant 0 : index
    %0 = vector.load %arg3[%c0, %c0_0] : memref<2x32xf32, #tpu.memory_space<vmem>>, vector<2x32xf32>
    %1 = vector.extract_strided_slice %0 {offsets = [0, 0], sizes = [1, 32], strides = [1, 1]} : vector<2x32xf32> to vector<1x32xf32>
    %2 = vector.extract_strided_slice %0 {offsets = [1, 0], sizes = [1, 32], strides = [1, 1]} : vector<2x32xf32> to vector<1x32xf32>
    %c0_1 = arith.constant 0 : index
    %c0_2 = arith.constant 0 : index
    %3 = vector.load %arg1[%c0_1, %c0_2] : memref<8x32xf32, #tpu.memory_space<vmem>>, vector<8x32xf32>
    %cst = arith.constant dense<0.000000e+00> : vector<1x8xf32>
    %4 = tpu.matmul %1, %3, %cst {dimension_numbers = #tpu.dot_dimension_numbers<[1], [1], [0], [0], [0, 0, 1, 0], [], []>} : vector<1x32xf32>, vector<8x32xf32>, vector<1x8xf32> -> vector<1x8xf32>
    %c0_3 = arith.constant 0 : index
    %c0_4 = arith.constant 0 : index
    %5 = vector.load %arg2[%c0_3, %c0_4] : memref<8x32xf32, #tpu.memory_space<vmem>>, vector<8x32xf32>
    %cst_5 = arith.constant dense<0.000000e+00> : vector<1x8xf32>
    %6 = tpu.matmul %2, %5, %cst_5 {dimension_numbers = #tpu.dot_dimension_numbers<[1], [1], [0], [0], [0, 0, 1, 0], [], []>} : vector<1x32xf32>, vector<8x32xf32>, vector<1x8xf32> -> vector<1x8xf32>
    %7 = arith.addf %4, %6 : vector<1x8xf32>
    %c0_6 = arith.constant 0 : index
    %c0_7 = arith.constant 0 : index
    %8 = memref.load %arg4[%c0_6, %c0_7] : memref<1x1xf32, #tpu.memory_space<smem>>
    %9 = vector.broadcast %8 : f32 to vector<1x8xf32>
    %10 = arith.addf %7, %9 : vector<1x8xf32>
    %cst_8 = arith.constant 0.000000e+00 : f32
    %11 = vector.broadcast %cst_8 : f32 to vector<1x8xf32>
    %12 = arith.subf %11, %10 : vector<1x8xf32>
    %13 = math.exp %12 : vector<1x8xf32>
    %cst_9 = arith.constant 1.000000e+00 : f32
    %14 = vector.broadcast %cst_9 : f32 to vector<1x8xf32>
    %15 = arith.addf %14, %13 : vector<1x8xf32>
    %cst_10 = arith.constant 1.000000e+00 : f32
    %16 = vector.broadcast %cst_10 : f32 to vector<1x8xf32>
    %17 = arith.divf %16, %15 : vector<1x8xf32>
    %c0_11 = arith.constant 0 : index
    %c0_12 = arith.constant 0 : index
    %18 = vector.load %arg5[%c0_11, %c0_12] : memref<1x8xf32, #tpu.memory_space<vmem>>, vector<1x8xf32>
    tpu.vector_store %arg5[%c0_11, %c0_12], %17 {strides = array<i32>} : memref<1x8xf32, #tpu.memory_space<vmem>>, vector<1x8xf32>,
    return
  }
  func.func @transform_0(%arg0: i32) -> (i32, i32) {
    %c0_i32 = arith.constant 0 : i32
    %c0_i32_0 = arith.constant 0 : i32
    return %arg0, %c0_i32 : i32, i32
  }
  func.func @transform_1(%arg0: i32) -> (i32, i32) {
    %c0_i32 = arith.constant 0 : i32
    %c0_i32_0 = arith.constant 0 : i32
    return %arg0, %c0_i32 : i32, i32
  }
  func.func @transform_2(%arg0: i32) -> (i32, i32) {
    %c0_i32 = arith.constant 0 : i32
    %c0_i32_0 = arith.constant 0 : i32
    %c0_i32_1 = arith.constant 0 : i32
    return %c0_i32, %c0_i32_0 : i32, i32
  }
  func.func @transform_3(%arg0: i32) -> (i32, i32) {
    %c0_i32 = arith.constant 0 : i32
    %c0_i32_0 = arith.constant 0 : i32
    %c0_i32_1 = arith.constant 0 : i32
    return %c0_i32, %c0_i32_0 : i32, i32
  }
  func.func @transform_4(%arg0: i32) -> (i32, i32) {
    %c0_i32 = arith.constant 0 : i32
    %c0_i32_0 = arith.constant 0 : i32
    return %c0_i32, %arg0 : i32, i32
  }
}

</mosaic_0001>

<llo_original>
// kernel: tpu_custom_call.1
$region0: #{tpu_custom_call.1}
  #allocation0 [shape = 'u32[]', space=smem, size = 0x4, offset = 0x4, fixed_abs, tag = 'smem constant byte address 0x4 - core index']
  #allocation1 [shape = 'u32[144,128]{1,0:T(1,128)}', space=vmem, size = 0x12000, scoped, tag = 'internal scratch']
  #allocation2 [shape = 'f32[1,1]{1,0:T(1,128)S(6)}', space=smem, size = 0x200, scoped, tag = 'scoped memory for tpu_custom_call.1']
  %s0 = inlined_call_operand.hbm [shape: f32[8,32], index: 0, kind: input, shape index: {}]
  %s1 = inlined_call_operand.hbm [shape: f32[8,32], index: 1, kind: input, shape index: {}]
  %s2 = inlined_call_operand.vmem [shape: f32[2,32], index: 2, kind: input, shape index: {}]
  %s3 = inlined_call_operand.<no memory space> [shape: f32[1,1], index: 3, kind: input, shape index: {}]
  %s4 = inlined_call_operand.hbm [shape: f32[1,8], index: 4, kind: output, shape index: {}]
  %s5 = sld [smem:[#allocation0]]
  $region34: #{tpu_custom_call.1} parent=0
    _
  %s7 = ssub.s32 1, %s5
  %s8 = scalar_select 0, %s7, %s5
  %9 = sst [smem:[#allocation2]] %s3
  $region1: #{tpu_custom_call.1} parent=0
    #allocation3 [shape = 'u8[4096]{0}', space=vmem, size = 0x1000, scoped, tag = 'input window, operand 0, single buffered']
    #allocation4 [shape = 's32[1]{0}', space=sflag, size = 0x4, scoped, tag = 'scoped memory for tpu_custom_call.1']
    #allocation5 [shape = 's32[1]{0}', space=sflag, size = 0x4, scoped, tag = 'scoped memory for tpu_custom_call.1']
    #allocation6 [shape = 'u8[4096]{0}', space=vmem, size = 0x1000, scoped, tag = 'input window, operand 1, single buffered']
    #allocation7 [shape = 's32[1]{0}', space=sflag, size = 0x4, scoped, tag = 'scoped memory for tpu_custom_call.1']
    #allocation8 [shape = 'u8[512]{0}', space=vmem, size = 0x400, scoped, tag = 'output window, operand 0, single buffered']
    %10 = vsyncpa [#allocation4], 0
    %11 = vsyncpa [#allocation7], 0
    %12 = vsyncpa [#allocation5], 0
    // Predicated region
    $region2: #{tpu_custom_call.1} parent=1 // pred_check
      _
    $region3: #{tpu_custom_call.1} parent=1 // pred_check_branch
      %14 = sbr.rel (0) target = $region5
    $region4: #{tpu_custom_call.1} parent=1 // pred_region
      %s16 = ssub.s32 128, 128
      %17 = vsyncadd [#allocation4], %s16
      %s19 = sshll.u32 [#allocation3], 4
      %s20 = int_to_ptr.vmem [resolvable:$true] %s19
      %22 = dma.hbm_to_vmem [thread:$0]  %s0, 128, %s20, [#allocation4]
    $region5: #{tpu_custom_call.1} parent=1 // pred_fallthru
      _
    // Predicated region
    $region6: #{tpu_custom_call.1} parent=1 // pred_check
      _
    $region7: #{tpu_custom_call.1} parent=1 // pred_check_branch
      %24 = sbr.rel (0) target = $region9
    $region8: #{tpu_custom_call.1} parent=1 // pred_region
      %s26 = ssub.s32 128, 128
      %27 = vsyncadd [#allocation7], %s26
      %s29 = sshll.u32 [#allocation6], 4
      %s30 = int_to_ptr.vmem [resolvable:$true] %s29
      %32 = dma.hbm_to_vmem [thread:$0]  %s1, 128, %s30, [#allocation7]
    $region9: #{tpu_custom_call.1} parent=1 // pred_fallthru
      _
    // Predicated region
    $region10: #{tpu_custom_call.1} parent=1 // pred_check
      _
    $region11: #{tpu_custom_call.1} parent=1 // pred_check_branch
      %34 = sbr.rel (0) target = $region13
    $region12: #{tpu_custom_call.1} parent=1 // pred_region
      _
    $region13: #{tpu_custom_call.1} parent=1 // pred_fallthru
      _
    // Predicated region
    $region14: #{tpu_custom_call.1} parent=1 // pred_check
      _
    $region15: #{tpu_custom_call.1} parent=1 // pred_check_branch
      %36 = sbr.rel (0) target = $region17
    $region16: #{tpu_custom_call.1} parent=1 // pred_region
      _
    $region17: #{tpu_custom_call.1} parent=1 // pred_fallthru
      _
    // Predicated region
    $region18: #{tpu_custom_call.1} parent=1 // pred_check
      _
    $region19: #{tpu_custom_call.1} parent=1 // pred_check_branch
      %38 = sbr.rel (0) target = $region21
    $region20: #{tpu_custom_call.1} parent=1 // pred_region
      %39 = dma.done [#allocation4], 128
    $region21: #{tpu_custom_call.1} parent=1 // pred_fallthru
      _
    // Predicated region
    $region22: #{tpu_custom_call.1} parent=1 // pred_check
      _
    $region23: #{tpu_custom_call.1} parent=1 // pred_check_branch
      %41 = sbr.rel (0) target = $region25
    $region24: #{tpu_custom_call.1} parent=1 // pred_region
      %42 = dma.done [#allocation7], 128
    $region25: #{tpu_custom_call.1} parent=1 // pred_fallthru
      _
    %v43 = vld [vmem:[%s2] sm:$0x3]
    %v44 = vld [vmem:[#allocation3] sm:$0xff]
    %v45 = vld [vmem:[#allocation6] sm:$0xff]
    %v47 = vrot.slane %v43, 1
    %vm48 = vcmask 261120
    %v49 = vsel %vm48, %v47, 0
    %v52 = vsel %vm48, %v45, 0
    %54 = vmatprep.subr.mxu0 0.0
    %55 = vmatpush1.xpose.msra.mxu0 %v52
    %56 = vmatprep.subr.mxu0 0.0
    %57 = vmatpush1.xpose.msra.mxu0 0.0
    %58 = vmatprep.subr.mxu0 0.0
    %59 = vmatpush1.xpose.msra.mxu0 0.0
    %60 = vmatprep.subr.mxu0 0.0
    %61 = vmatpush1.xpose.msra.mxu0 0.0
    %62 = vmatprep.subr.mxu0 0.0
    %63 = vmatpush1.xpose.msra.mxu0 0.0
    %64 = vmatprep.subr.mxu0 0.0
    %65 = vmatpush1.xpose.msra.mxu0 0.0
    %66 = vmatprep.subr.mxu0 0.0
    %67 = vmatpush1.xpose.msra.mxu0 0.0
    %68 = vmatprep.subr.mxu0 0.0
    %69 = vmatpush1.xpose.msra.mxu0 0.0
    %70 = vmatprep.subr.mxu0 0.0
    %71 = vmatpush1.xpose.msra.mxu0 0.0
    %72 = vmatprep.subr.mxu0 0.0
    %73 = vmatpush1.xpose.msra.mxu0 0.0
    %74 = vmatprep.subr.mxu0 0.0
    %75 = vmatpush1.xpose.msra.mxu0 0.0
    %76 = vmatprep.subr.mxu0 0.0
    %77 = vmatpush1.xpose.msra.mxu0 0.0
    %78 = vmatprep.subr.mxu0 0.0
    %79 = vmatpush1.xpose.msra.mxu0 0.0
    %80 = vmatprep.subr.mxu0 0.0
    %81 = vmatpush1.xpose.msra.mxu0 0.0
    %82 = vmatprep.subr.mxu0 0.0
    %83 = vmatpush1.xpose.msra.mxu0 0.0
    %84 = vmatprep.subr.mxu0 0.0
    %85 = vmatpush1.xpose.msra.mxu0 0.0
    %86 = vmatprep.subr.mxu0 0.0
    %87 = vmatpush1.xpose.msra.mxu0 0.0
    %88 = vmatprep.subr.mxu0 0.0
    %89 = vmatpush1.xpose.msra.mxu0 0.0
    %90 = vmatprep.subr.mxu0 0.0
    %91 = vmatpush1.xpose.msra.mxu0 0.0
    %92 = vmatprep.subr.mxu0 0.0
    %93 = vmatpush1.xpose.msra.mxu0 0.0
    %94 = vmatprep.subr.mxu0 0.0
    %95 = vmatpush1.xpose.msra.mxu0 0.0
    %96 = vmatprep.subr.mxu0 0.0
    %97 = vmatpush1.xpose.msra.mxu0 0.0
    %98 = vmatprep.subr.mxu0 0.0
    %99 = vmatpush1.xpose.msra.mxu0 0.0
    %100 = vmatprep.subr.mxu0 0.0
    %101 = vmatpush1.xpose.msra.mxu0 0.0
    %102 = vmatprep.subr.mxu0 0.0
    %103 = vmatpush1.xpose.msra.mxu0 0.0
    %104 = vmatprep.subr.mxu0 0.0
    %105 = vmatpush1.xpose.msra.mxu0 0.0
    %106 = vmatprep.subr.mxu0 0.0
    %107 = vmatpush1.xpose.msra.mxu0 0.0
    %108 = vmatprep.subr.mxu0 0.0
    %109 = vmatpush1.xpose.msra.mxu0 0.0
    %110 = vmatprep.subr.mxu0 0.0
    %111 = vmatpush1.xpose.msra.mxu0 0.0
    %112 = vmatprep.subr.mxu0 0.0
    %113 = vmatpush1.xpose.msra.mxu0 0.0
    %114 = vmatprep.subr.mxu0 0.0
    %115 = vmatpush1.xpose.msra.mxu0 0.0
    %116 = vmatprep.subr.mxu0 0.0
    %117 = vmatpush1.xpose.msra.mxu0 0.0
    %118 = vmatprep.mubr.f32.mxu0 0.0
    %119 = vmatmul.mubr.f32.gmra.mrb[0].mxu0 %v49
    %v120 = vpop.f32.mrb[0].mxu0
    %v121 = vadd.f32 0.0, %v120
    %v122 = vpop.f32.mrb[0].mxu0
    %123 = vdwg.mxu0
    %v124 = vsel %vm48, %v43, 0
    %v127 = vsel %vm48, %v44, 0
    %129 = vmatprep.subr.mxu0 0.0
    %130 = vmatpush1.xpose.msra.mxu0 %v127
    %131 = vmatprep.subr.mxu0 0.0
    %132 = vmatpush1.xpose.msra.mxu0 0.0
    %133 = vmatprep.subr.mxu0 0.0
    %134 = vmatpush1.xpose.msra.mxu0 0.0
    %135 = vmatprep.subr.mxu0 0.0
    %136 = vmatpush1.xpose.msra.mxu0 0.0
    %137 = vmatprep.subr.mxu0 0.0
    %138 = vmatpush1.xpose.msra.mxu0 0.0
    %139 = vmatprep.subr.mxu0 0.0
    %140 = vmatpush1.xpose.msra.mxu0 0.0
    %141 = vmatprep.subr.mxu0 0.0
    %142 = vmatpush1.xpose.msra.mxu0 0.0
    %143 = vmatprep.subr.mxu0 0.0
    %144 = vmatpush1.xpose.msra.mxu0 0.0
    %145 = vmatprep.subr.mxu0 0.0
    %146 = vmatpush1.xpose.msra.mxu0 0.0
    %147 = vmatprep.subr.mxu0 0.0
    %148 = vmatpush1.xpose.msra.mxu0 0.0
    %149 = vmatprep.subr.mxu0 0.0
    %150 = vmatpush1.xpose.msra.mxu0 0.0
    %151 = vmatprep.subr.mxu0 0.0
    %152 = vmatpush1.xpose.msra.mxu0 0.0
    %153 = vmatprep.subr.mxu0 0.0
    %154 = vmatpush1.xpose.msra.mxu0 0.0
    %155 = vmatprep.subr.mxu0 0.0
    %156 = vmatpush1.xpose.msra.mxu0 0.0
    %157 = vmatprep.subr.mxu0 0.0
    %158 = vmatpush1.xpose.msra.mxu0 0.0
    %159 = vmatprep.subr.mxu0 0.0
    %160 = vmatpush1.xpose.msra.mxu0 0.0
    %161 = vmatprep.subr.mxu0 0.0
    %162 = vmatpush1.xpose.msra.mxu0 0.0
    %163 = vmatprep.subr.mxu0 0.0
    %164 = vmatpush1.xpose.msra.mxu0 0.0
    %165 = vmatprep.subr.mxu0 0.0
    %166 = vmatpush1.xpose.msra.mxu0 0.0
    %167 = vmatprep.subr.mxu0 0.0
    %168 = vmatpush1.xpose.msra.mxu0 0.0
    %169 = vmatprep.subr.mxu0 0.0
    %170 = vmatpush1.xpose.msra.mxu0 0.0
    %171 = vmatprep.subr.mxu0 0.0
    %172 = vmatpush1.xpose.msra.mxu0 0.0
    %173 = vmatprep.subr.mxu0 0.0
    %174 = vmatpush1.xpose.msra.mxu0 0.0
    %175 = vmatprep.subr.mxu0 0.0
    %176 = vmatpush1.xpose.msra.mxu0 0.0
    %177 = vmatprep.subr.mxu0 0.0
    %178 = vmatpush1.xpose.msra.mxu0 0.0
    %179 = vmatprep.subr.mxu0 0.0
    %180 = vmatpush1.xpose.msra.mxu0 0.0
    %181 = vmatprep.subr.mxu0 0.0
    %182 = vmatpush1.xpose.msra.mxu0 0.0
    %183 = vmatprep.subr.mxu0 0.0
    %184 = vmatpush1.xpose.msra.mxu0 0.0
    %185 = vmatprep.subr.mxu0 0.0
    %186 = vmatpush1.xpose.msra.mxu0 0.0
    %187 = vmatprep.subr.mxu0 0.0
    %188 = vmatpush1.xpose.msra.mxu0 0.0
    %189 = vmatprep.subr.mxu0 0.0
    %190 = vmatpush1.xpose.msra.mxu0 0.0
    %191 = vmatprep.subr.mxu0 0.0
    %192 = vmatpush1.xpose.msra.mxu0 0.0
    %193 = vmatprep.mubr.f32.mxu0 0.0
    %194 = vmatmul.mubr.f32.gmra.mrb[0].mxu0 %v124
    %v195 = vpop.f32.mrb[0].mxu0
    %v196 = vadd.f32 %v121, %v195
    %v197 = vpop.f32.mrb[0].mxu0
    %198 = vdwg.mxu0
    %s199 = sld [smem:[#allocation2]]
    %v200 = vstv %s199
    %v201 = vadd.f32 %v196, %v200
    %v202 = vsub.f32 0.0, %v201
    %v203 = vmul.f32 %v202, 1.442695
    %v204 = vpow.pop %v203
    %v205 = vadd.f32 %v204, 1.0
    %v206 = vrcp.pop %v205
    %v207 = vmul.f32 1.0, %v206
    %vm208 = vcmask 57344
    %209 = vst.msk [vmem:[#allocation8] sm:$0x1] %vm208, %v207
    // Predicated region
    $region26: #{tpu_custom_call.1} parent=1 // pred_check
      _
    $region27: #{tpu_custom_call.1} parent=1 // pred_check_branch
      %211 = sbr.rel (0) target = $region29
    $region28: #{tpu_custom_call.1} parent=1 // pred_region
      %s213 = ssub.s32 16, 16
      %214 = vsyncadd [#allocation5], %s213
      %s216 = sshll.u32 [#allocation8], 4
      %s217 = int_to_ptr.vmem [resolvable:$true] %s216
      %219 = dma.vmem_to_hbm [thread:$0]  %s217, 16, %s4, [#allocation5]
    $region29: #{tpu_custom_call.1} parent=1 // pred_fallthru
      _
    // Predicated region
    $region30: #{tpu_custom_call.1} parent=1 // pred_check
      _
    $region31: #{tpu_custom_call.1} parent=1 // pred_check_branch
      %221 = sbr.rel (0) target = $region33
    $region32: #{tpu_custom_call.1} parent=1 // pred_region
      %222 = dma.done [#allocation5], 16
    $region33: #{tpu_custom_call.1} parent=1 // pred_fallthru
      _
    %223 = vsyncpa [#allocation4], 1
    %224 = vsyncpa [#allocation7], 1
    %225 = vsyncpa [#allocation5], 1

</llo_original>
